<compile_context>
chip_gen: v7x
topology: tpu7x:2x2x1
jax: 0.10.0
libtpu: 0.0.40
codegen_flags: <defaults>
</compile_context>

<pallas_src>
import functools

import jax
import jax.numpy as jnp
import numpy as np
from jax.experimental import pallas as pl
from jax.experimental.pallas import tpu as pltpu

# Small shapes consistent with the module's forward semantics.
B = 2            # batch
SEQ = 8          # fmri_seq_len
LAT = 32         # fmri_latent_dim
OUTC = 16        # out_channel
OUTD = 8         # out_dim
P = OUTD * OUTD  # out_dim ** 2 = 64


def _fmri_kernel(x_ref, slab_ref, o_ref, *, bsz):
    nlat = bsz * LAT
    nlanes = bsz * P
    # Static row offsets inside the packed weight slab.
    r_w12 = nlat
    r_b3 = r_w12 + OUTC
    r_w4 = r_b3 + OUTC
    r_lm = r_w4 + OUTC
    r_rm = r_lm + 1

    # Pack the batch along lanes in-kernel (replaces the wrapper transpose):
    # (B, SEQ, LAT) -> (SEQ, B*LAT).
    x = jnp.concatenate([x_ref[b] for b in range(bsz)], axis=1)

    # Unpack the weight slab with static slices.
    w3bd = slab_ref[0:nlat, :]                           # (B*LAT, B*P) block-diag dim_mapper
    w12 = slab_ref[r_w12:r_w12 + OUTC, 0:SEQ]            # (OUTC, SEQ) fused 1x1 convs
    b3_eff = slab_ref[r_b3:r_b3 + OUTC, :]               # (OUTC, B*P) fused bias (b12 folded in)
    w4cat = slab_ref[r_w4:r_w4 + OUTC, 0:3 * OUTC + 1]   # (OUTC, 3*OUTC+1) [w4_l|w4_c|w4_r|b4]
    lmask = slab_ref[r_lm:r_lm + 1, :]                   # (1, B*P) 0/1 left-tap mask
    rmask = slab_ref[r_rm:r_rm + 1, :]                   # (1, B*P) 0/1 right-tap mask

    # Reordered mapper chain: contract LAT first, then the (fused) channel dim.
    t = jnp.dot(x, w3bd, preferred_element_type=jnp.float32)            # (SEQ, B*P)
    h3 = jnp.dot(w12, t, preferred_element_type=jnp.float32) + b3_eff   # (OUTC, B*P)
    h3 = h3 * jax.nn.sigmoid(h3)                                        # SiLU

    # out: Conv1d(OUTC -> OUTC, k=3, padding=1) along each batch's P lanes.
    # Neighbour columns via XLU lane rotations; precomputed masks zero the
    # wrap-around lane of every P-lane block (conv zero padding, no
    # cross-batch leakage).
    left = pltpu.roll(h3, 1, axis=1) * lmask              # left[:, l]  == h3[:, l-1]
    right = pltpu.roll(h3, nlanes - 1, axis=1) * rmask    # right[:, l] == h3[:, l+1]

    # Single fused conv-tap matmul (bias absorbed via the ones row).
    ones = jnp.ones((1, nlanes), jnp.float32)
    s = jnp.concatenate([left, h3, right, ones], axis=0)                 # (3*OUTC+1, B*P)
    out = jnp.dot(w4cat, s, preferred_element_type=jnp.float32)          # (OUTC, B*P)

    # Store directly in (B, OUTC, P) layout so the wrapper reshape is free.
    for b in range(bsz):
        o_ref[b] = out[:, b * P:(b + 1) * P].astype(o_ref.dtype)


def prepare_params(params, bsz=B):
    """One-time weight pack: returns a single (rows, B*P) f32 slab."""
    w1, b1, w2, b2, w3t, b3, w4, b4 = params
    nlanes = bsz * P

    # Fuse the two 1x1 convs offline.
    w12 = w2 @ w1                                        # (OUTC, SEQ)
    b12 = w2 @ b1 + b2                                   # (OUTC, 1)

    # Block-diagonal dim_mapper weight: both batches share the lane axis.
    w3bd = jnp.kron(jnp.eye(bsz, dtype=w3t.dtype), w3t)  # (B*LAT, B*P)
    b3t = jnp.tile(b3, (1, bsz))                         # (1, B*P)

    # Fold b12 through the dim_mapper so the kernel's reordered chain
    # (t = x @ w3bd; h3 = W12 @ t + b3_eff) matches h2 @ w3bd + b3.
    col_sum = jnp.sum(w3bd, axis=0, keepdims=True)       # (1, B*P)
    b3_eff = b3t + b12 @ col_sum                         # (OUTC, B*P)

    # One fused conv-tap weight, bias as the last column (ones-row trick).
    w4cat = jnp.concatenate([w4[0], w4[1], w4[2], b4], axis=1)  # (OUTC, 3*OUTC+1)

    # Precomputed k=3 boundary masks (conv zero padding at each P-block edge).
    lane = jnp.arange(nlanes)
    lmask = (lane % P != 0).astype(jnp.float32)[None, :]        # (1, B*P)
    rmask = (lane % P != P - 1).astype(jnp.float32)[None, :]    # (1, B*P)

    def padcols(a):
        return jnp.pad(a, ((0, 0), (0, nlanes - a.shape[1])))

    slab = jnp.concatenate(
        [w3bd, padcols(w12), b3_eff, padcols(w4cat), lmask, rmask], axis=0)
    pad_rows = (-slab.shape[0]) % 8
    if pad_rows:
        slab = jnp.pad(slab, ((0, pad_rows), (0, 0)))
    return slab                                          # (120, 128) at B=2


@jax.jit
def fmri_to_control(x, slab):
    """x: (B, SEQ, LAT) f32, slab: prepare_params(...). Returns (B, OUTC, OUTD, OUTD)."""
    bsz = x.shape[0]
    out = pl.pallas_call(
        functools.partial(_fmri_kernel, bsz=bsz),
        out_shape=jax.ShapeDtypeStruct((bsz, OUTC, P), jnp.float32),
        in_specs=[pl.BlockSpec(memory_space=pltpu.MemorySpace.VMEM)] * 2,
        out_specs=pl.BlockSpec(memory_space=pltpu.MemorySpace.VMEM),
    )(x, slab)
    # (B, OUTC, P) -> (B, OUTC, OUTD, OUTD): pure reshape, no transpose launch.
    return out.reshape(bsz, OUTC, OUTD, OUTD)


def make_params(key):
    k1, k2, k3, k4, k5, k6 = jax.random.split(key, 6)
    # channel_mapper[0]: Conv1d(SEQ, 2*SEQ, 1) -> weight (2*SEQ, SEQ), bias (2*SEQ, 1)
    w1 = 0.05 * jax.random.normal(k1, (2 * SEQ, SEQ), jnp.float32)
    b1 = 0.01 * jax.random.normal(k2, (2 * SEQ, 1), jnp.float32)
    # channel_mapper[1]: Conv1d(2*SEQ, OUTC, 1) -> weight (OUTC, 2*SEQ), bias (OUTC, 1)
    w2 = 0.05 * jax.random.normal(k3, (OUTC, 2 * SEQ), jnp.float32)
    b2 = 0.01 * jax.random.normal(k4, (OUTC, 1), jnp.float32)
    # dim_mapper: Linear(LAT, P) -> weight (P, LAT); stored transposed as (LAT, P)
    w3t = 0.05 * jax.random.normal(k5, (LAT, P), jnp.float32)
    b3 = 0.01 * jax.random.normal(k6, (1, P), jnp.float32)
    # out: zero_module(Conv1d(OUTC, OUTC, 3, padding=1)) -> zero weight/bias.
    # Stored as (K, OUTC, OUTC): w4[k] == torch_weight[:, :, k].
    w4 = jnp.zeros((3, OUTC, OUTC), jnp.float32)
    b4 = jnp.zeros((OUTC, 1), jnp.float32)
    return (w1, b1, w2, b2, w3t, b3, w4, b4)


def reference_forward(x, params):
    """Pure-JAX reference mirroring the PyTorch module."""
    w1, b1, w2, b2, w3t, b3, w4, b4 = params

    def per_batch(xb):                                   # xb: (SEQ, LAT)
        h1 = w1 @ xb + b1                                # (2*SEQ, LAT)
        h2 = w2 @ h1 + b2                                # (OUTC, LAT)
        h3 = h2 @ w3t + b3                               # (OUTC, P)
        h3 = jax.nn.silu(h3)
        pad = jnp.pad(h3, ((0, 0), (1, 1)))              # conv1d k=3, padding=1
        out = (w4[0] @ pad[:, 0:P] + w4[1] @ pad[:, 1:P + 1]
               + w4[2] @ pad[:, 2:P + 2] + b4)
        return out

    out = jax.vmap(per_batch)(x)                         # (B, OUTC, P)
    return out.reshape(x.shape[0], OUTC, OUTD, OUTD)


if __name__ == "__main__":
    key = jax.random.PRNGKey(0)
    kx, kp, kw, kb = jax.random.split(key, 4)
    x = jax.random.normal(kx, (B, SEQ, LAT), jnp.float32)

    # 1) Params exactly as the module builds them (zero_module => out conv is 0).
    params = make_params(kp)
    slab = jax.block_until_ready(prepare_params(params, B))   # one-time pack
    out = jax.block_until_ready(fmri_to_control(x, slab))
    ref = jax.block_until_ready(reference_forward(x, params))
    assert out.shape == (B, OUTC, OUTD, OUTD), out.shape
    np.testing.assert_allclose(np.asarray(out), np.asarray(ref), atol=1e-5, rtol=1e-4)

    # 2) Same forward with non-zero out-conv params so the fused k=3 tap path
    #    (roll + masks + single matmul + bias-as-ones-row) is exercised.
    params_nz = params[:6] + (
        0.05 * jax.random.normal(kw, (3, OUTC, OUTC), jnp.float32),
        0.01 * jax.random.normal(kb, (OUTC, 1), jnp.float32),
    )
    slab_nz = jax.block_until_ready(prepare_params(params_nz, B))
    out_nz = jax.block_until_ready(fmri_to_control(x, slab_nz))
    ref_nz = jax.block_until_ready(reference_forward(x, params_nz))
    np.testing.assert_allclose(np.asarray(out_nz), np.asarray(ref_nz),
                               atol=1e-5, rtol=1e-4)

    print("KERNEL_OK")
</pallas_src>

<mosaic_0001>
module attributes {stable_mosaic.version = 11 : i64} {
  func.func @_fmri_kernel(%arg0: memref<2x8x32xf32, #tpu.memory_space<vmem>>, %arg1: memref<120x128xf32, #tpu.memory_space<vmem>>, %arg2: memref<2x16x64xf32, #tpu.memory_space<vmem>>) attributes {dimension_semantics = [], scalar_prefetch = 0 : i64, scratch_operands = 0 : i64, tpu.core_type = #tpu.core_type<tc>} {
    %c0 = arith.constant 0 : index
    %c0_0 = arith.constant 0 : index
    %c0_1 = arith.constant 0 : index
    %0 = vector.load %arg0[%c0, %c0_0, %c0_1] : memref<2x8x32xf32, #tpu.memory_space<vmem>>, vector<1x8x32xf32>
    %1 = vector.shape_cast %0 : vector<1x8x32xf32> to vector<8x32xf32>
    %c1 = arith.constant 1 : index
    %c0_2 = arith.constant 0 : index
    %c0_3 = arith.constant 0 : index
    %2 = vector.load %arg0[%c1, %c0_2, %c0_3] : memref<2x8x32xf32, #tpu.memory_space<vmem>>, vector<1x8x32xf32>
    %3 = vector.shape_cast %2 : vector<1x8x32xf32> to vector<8x32xf32>
    %4 = tpu.concatenate %1, %3 in 1 : vector<8x32xf32>, vector<8x32xf32> -> vector<8x64xf32>
    %c0_4 = arith.constant 0 : index
    %c0_5 = arith.constant 0 : index
    %5 = vector.load %arg1[%c0_4, %c0_5] : memref<120x128xf32, #tpu.memory_space<vmem>>, vector<64x128xf32>
    %c64 = arith.constant 64 : index
    %c0_6 = arith.constant 0 : index
    %6 = vector.load %arg1[%c64, %c0_6] : memref<120x128xf32, #tpu.memory_space<vmem>>, vector<16x8xf32>
    %c80 = arith.constant 80 : index
    %c0_7 = arith.constant 0 : index
    %7 = vector.load %arg1[%c80, %c0_7] : memref<120x128xf32, #tpu.memory_space<vmem>>, vector<16x128xf32>
    %c96 = arith.constant 96 : index
    %c0_8 = arith.constant 0 : index
    %8 = vector.load %arg1[%c96, %c0_8] : memref<120x128xf32, #tpu.memory_space<vmem>>, vector<16x49xf32>
    %c112 = arith.constant 112 : index
    %c0_9 = arith.constant 0 : index
    %9 = vector.load %arg1[%c112, %c0_9] : memref<120x128xf32, #tpu.memory_space<vmem>>, vector<1x128xf32>
    %c113 = arith.constant 113 : index
    %c0_10 = arith.constant 0 : index
    %10 = vector.load %arg1[%c113, %c0_10] : memref<120x128xf32, #tpu.memory_space<vmem>>, vector<1x128xf32>
    %cst = arith.constant dense<0.000000e+00> : vector<8x128xf32>
    %11 = tpu.matmul %4, %5, %cst {dimension_numbers = #tpu.dot_dimension_numbers<[1], [0], [0], [1], [0, 0, 1, 1], [], []>} : vector<8x64xf32>, vector<64x128xf32>, vector<8x128xf32> -> vector<8x128xf32>
    %cst_11 = arith.constant dense<0.000000e+00> : vector<16x128xf32>
    %12 = tpu.matmul %6, %11, %cst_11 {dimension_numbers = #tpu.dot_dimension_numbers<[1], [0], [0], [1], [0, 0, 1, 1], [], []>} : vector<16x8xf32>, vector<8x128xf32>, vector<16x128xf32> -> vector<16x128xf32>
    %13 = arith.addf %12, %7 : vector<16x128xf32>
    %14 = arith.negf %13 : vector<16x128xf32>
    %15 = math.exp %14 : vector<16x128xf32>
    %cst_12 = arith.constant 1.000000e+00 : f32
    %16 = vector.broadcast %cst_12 : f32 to vector<16x128xf32>
    %17 = arith.addf %16, %15 : vector<16x128xf32>
    %18 = arith.divf %16, %17 : vector<16x128xf32>
    %19 = arith.mulf %13, %18 : vector<16x128xf32>
    %c1_i32 = arith.constant 1 : i32
    %20 = tpu.dynamic_rotate %19 by %c1_i32 dim 1 : vector<16x128xf32>, i32 -> vector<16x128xf32>
    %21 = vector.broadcast %9 : vector<1x128xf32> to vector<16x128xf32>
    %22 = arith.mulf %20, %21 : vector<16x128xf32>
    %c127_i32 = arith.constant 127 : i32
    %23 = tpu.dynamic_rotate %19 by %c127_i32 dim 1 : vector<16x128xf32>, i32 -> vector<16x128xf32>
    %24 = vector.broadcast %10 : vector<1x128xf32> to vector<16x128xf32>
    %25 = arith.mulf %23, %24 : vector<16x128xf32>
    %cst_13 = arith.constant 1.000000e+00 : f32
    %26 = vector.broadcast %cst_13 : f32 to vector<1x128xf32>
    %27 = tpu.concatenate %22, %19, %25, %26 in 0 : vector<16x128xf32>, vector<16x128xf32>, vector<16x128xf32>, vector<1x128xf32> -> vector<49x128xf32>
    %cst_14 = arith.constant dense<0.000000e+00> : vector<16x128xf32>
    %28 = tpu.matmul %8, %27, %cst_14 {dimension_numbers = #tpu.dot_dimension_numbers<[1], [0], [0], [1], [0, 0, 1, 1], [], []>} : vector<16x49xf32>, vector<49x128xf32>, vector<16x128xf32> -> vector<16x128xf32>
    %29 = vector.extract_strided_slice %28 {offsets = [0, 0], sizes = [16, 64], strides = [1, 1]} : vector<16x128xf32> to vector<16x64xf32>
    %c0_15 = arith.constant 0 : index
    %c0_16 = arith.constant 0 : index
    %c0_17 = arith.constant 0 : index
    %30 = vector.load %arg2[%c0_15, %c0_16, %c0_17] : memref<2x16x64xf32, #tpu.memory_space<vmem>>, vector<1x16x64xf32>
    %31 = vector.shape_cast %30 : vector<1x16x64xf32> to vector<16x64xf32>
    %32 = vector.shape_cast %29 : vector<16x64xf32> to vector<1x16x64xf32>
    tpu.vector_store %arg2[%c0_15, %c0_16, %c0_17], %32 {strides = array<i32>} : memref<2x16x64xf32, #tpu.memory_space<vmem>>, vector<1x16x64xf32>,
    %33 = vector.extract_strided_slice %28 {offsets = [0, 64], sizes = [16, 64], strides = [1, 1]} : vector<16x128xf32> to vector<16x64xf32>
    %c1_18 = arith.constant 1 : index
    %c0_19 = arith.constant 0 : index
    %c0_20 = arith.constant 0 : index
    %34 = vector.load %arg2[%c1_18, %c0_19, %c0_20] : memref<2x16x64xf32, #tpu.memory_space<vmem>>, vector<1x16x64xf32>
    %35 = vector.shape_cast %34 : vector<1x16x64xf32> to vector<16x64xf32>
    %36 = vector.shape_cast %33 : vector<16x64xf32> to vector<1x16x64xf32>
    tpu.vector_store %arg2[%c1_18, %c0_19, %c0_20], %36 {strides = array<i32>} : memref<2x16x64xf32, #tpu.memory_space<vmem>>, vector<1x16x64xf32>,
    return
  }
}

</mosaic_0001>

<llo_original>
// kernel: fmri_to_control.1
$region0: #{fmri_to_control.1}
  #allocation0 [shape = 'u32[]', space=smem, size = 0x4, offset = 0x4, fixed_abs, tag = 'smem constant byte address 0x4 - core index']
  #allocation1 [shape = 'u32[144,128]{1,0:T(1,128)}', space=vmem, size = 0x12000, scoped, tag = 'internal scratch']
  %s0 = inlined_call_operand.hbm [shape: f32[2,8,32], index: 0, kind: input, shape index: {}]
  %s1 = inlined_call_operand.hbm [shape: f32[120,128], index: 1, kind: input, shape index: {}]
  %s2 = inlined_call_operand.vmem [shape: f32[2,16,64], index: 2, kind: output, shape index: {}]
  %s3 = sld [smem:[#allocation0]]
  $region26: #{fmri_to_control.1} parent=0
    _
  %s5 = ssub.s32 1, %s3
  %s6 = scalar_select 0, %s5, %s3
  $region1: #{fmri_to_control.1} parent=0
    #allocation2 [shape = 'u8[8192]{0}', space=vmem, size = 0x2000, scoped, tag = 'input window, operand 0, single buffered']
    #allocation3 [shape = 's32[1]{0}', space=sflag, size = 0x4, scoped, tag = 'scoped memory for fmri_to_control.1']
    #allocation4 [shape = 'u8[61440]{0}', space=vmem, size = 0xf000, scoped, tag = 'input window, operand 1, single buffered']
    #allocation5 [shape = 's32[1]{0}', space=sflag, size = 0x4, scoped, tag = 'scoped memory for fmri_to_control.1']
    %7 = vsyncpa [#allocation3], 0
    %8 = vsyncpa [#allocation5], 0
    // Predicated region
    $region2: #{fmri_to_control.1} parent=1 // pred_check
      _
    $region3: #{fmri_to_control.1} parent=1 // pred_check_branch
      %10 = sbr.rel (0) target = $region5
    $region4: #{fmri_to_control.1} parent=1 // pred_region
      %s12 = ssub.s32 256, 256
      %13 = vsyncadd [#allocation3], %s12
      %s14 = sshll.u32 [#allocation2], 4
      %s15 = int_to_ptr.vmem [resolvable:$true] %s14
      %20 = dma.hbm_to_vmem [thread:$0]  %s0, 256, %s15, [#allocation3], 128, 128, 8
    $region5: #{fmri_to_control.1} parent=1 // pred_fallthru
      _
    // Predicated region
    $region6: #{fmri_to_control.1} parent=1 // pred_check
      _
    $region7: #{fmri_to_control.1} parent=1 // pred_check_branch
      %22 = sbr.rel (0) target = $region9
    $region8: #{fmri_to_control.1} parent=1 // pred_region
      %s24 = ssub.s32 1920, 1920
      %25 = vsyncadd [#allocation5], %s24
      %s26 = sshll.u32 [#allocation4], 4
      %s27 = int_to_ptr.vmem [resolvable:$true] %s26
      %32 = dma.hbm_to_vmem [thread:$0]  %s1, 1920, %s27, [#allocation5], 128, 128, 8
    $region9: #{fmri_to_control.1} parent=1 // pred_fallthru
      _
    // Predicated region
    $region10: #{fmri_to_control.1} parent=1 // pred_check
      _
    $region11: #{fmri_to_control.1} parent=1 // pred_check_branch
      %34 = sbr.rel (0) target = $region13
    $region12: #{fmri_to_control.1} parent=1 // pred_region
      %35 = dma.done [#allocation3], 256
    $region13: #{fmri_to_control.1} parent=1 // pred_fallthru
      _
    // Predicated region
    $region14: #{fmri_to_control.1} parent=1 // pred_check
      _
    $region15: #{fmri_to_control.1} parent=1 // pred_check_branch
      %37 = sbr.rel (0) target = $region17
    $region16: #{fmri_to_control.1} parent=1 // pred_region
      %38 = dma.done [#allocation5], 1920
    $region17: #{fmri_to_control.1} parent=1 // pred_fallthru
      _
    %v39 = vld [vmem:[#allocation2] sm:$0xff]
    %s40 = scalar_lea.vmem [#allocation2], 8
    %v41 = vld [vmem:[%s40] sm:$0xff]
    %43 = vrot.lane.b32.xlu0 %v41, 32
    %v44 = vpop.permute.xlu0 %43
    %vm46 = vcmask 261120
    %v47 = vsel %vm46, %v39, %v44
    %v48 = vld [vmem:[#allocation4] sm:$0xff]
    %v49 = vld [vmem:[#allocation4 + $0x8] sm:$0xff]
    %v50 = vld [vmem:[#allocation4 + $0x10] sm:$0xff]
    %v51 = vld [vmem:[#allocation4 + $0x18] sm:$0xff]
    %v52 = vld [vmem:[#allocation4 + $0x20] sm:$0xff]
    %v53 = vld [vmem:[#allocation4 + $0x28] sm:$0xff]
    %v54 = vld [vmem:[#allocation4 + $0x30] sm:$0xff]
    %v55 = vld [vmem:[#allocation4 + $0x38] sm:$0xff]
    %v56 = vld [vmem:[#allocation4 + $0x40] sm:$0xff]
    %v57 = vld [vmem:[#allocation4 + $0x48] sm:$0xff]
    %v58 = vld [vmem:[#allocation4 + $0x50] sm:$0xff]
    %v59 = vld [vmem:[#allocation4 + $0x58] sm:$0xff]
    %v60 = vld [vmem:[#allocation4 + $0x60] sm:$0xff]
    %v61 = vld [vmem:[#allocation4 + $0x68] sm:$0xff]
    %v62 = vld [vmem:[#allocation4 + $0x70] sm:$0x1]
    %v63 = vld [vmem:[#allocation4 + $0x71] sm:$0x1]
    %vm64 = vcmask 523264
    %v66 = vsel %vm64, %v47, 0
    %68 = vmatprep.subr.mxu0 0.0
    %69 = vmatpush1.msra.mxu0 %v48
    %70 = vmatprep.subr.mxu0 0.0
    %71 = vmatpush1.msra.mxu0 %v49
    %72 = vmatprep.subr.mxu0 0.0
    %73 = vmatpush1.msra.mxu0 %v50
    %74 = vmatprep.subr.mxu0 0.0
    %75 = vmatpush1.msra.mxu0 %v51
    %76 = vmatprep.subr.mxu0 0.0
    %77 = vmatpush1.msra.mxu0 %v52
    %78 = vmatprep.subr.mxu0 0.0
    %79 = vmatpush1.msra.mxu0 %v53
    %80 = vmatprep.subr.mxu0 0.0
    %81 = vmatpush1.msra.mxu0 %v54
    %82 = vmatprep.subr.mxu0 0.0
    %83 = vmatpush1.msra.mxu0 %v55
    %84 = vmatprep.subr.mxu0 0.0
    %85 = vmatpush1.msra.mxu0 0.0
    %86 = vmatprep.subr.mxu0 0.0
    %87 = vmatpush1.msra.mxu0 0.0
    %88 = vmatprep.subr.mxu0 0.0
    %89 = vmatpush1.msra.mxu0 0.0
    %90 = vmatprep.subr.mxu0 0.0
    %91 = vmatpush1.msra.mxu0 0.0
    %92 = vmatprep.subr.mxu0 0.0
    %93 = vmatpush1.msra.mxu0 0.0
    %94 = vmatprep.subr.mxu0 0.0
    %95 = vmatpush1.msra.mxu0 0.0
    %96 = vmatprep.subr.mxu0 0.0
    %97 = vmatpush1.msra.mxu0 0.0
    %98 = vmatprep.subr.mxu0 0.0
    %99 = vmatpush1.msra.mxu0 0.0
    %100 = vmatprep.subr.mxu0 0.0
    %101 = vmatpush1.msra.mxu0 0.0
    %102 = vmatprep.subr.mxu0 0.0
    %103 = vmatpush1.msra.mxu0 0.0
    %104 = vmatprep.subr.mxu0 0.0
    %105 = vmatpush1.msra.mxu0 0.0
    %106 = vmatprep.subr.mxu0 0.0
    %107 = vmatpush1.msra.mxu0 0.0
    %108 = vmatprep.subr.mxu0 0.0
    %109 = vmatpush1.msra.mxu0 0.0
    %110 = vmatprep.subr.mxu0 0.0
    %111 = vmatpush1.msra.mxu0 0.0
    %112 = vmatprep.subr.mxu0 0.0
    %113 = vmatpush1.msra.mxu0 0.0
    %114 = vmatprep.subr.mxu0 0.0
    %115 = vmatpush1.msra.mxu0 0.0
    %116 = vmatprep.subr.mxu0 0.0
    %117 = vmatpush1.msra.mxu0 0.0
    %118 = vmatprep.subr.mxu0 0.0
    %119 = vmatpush1.msra.mxu0 0.0
    %120 = vmatprep.subr.mxu0 0.0
    %121 = vmatpush1.msra.mxu0 0.0
    %122 = vmatprep.subr.mxu0 0.0
    %123 = vmatpush1.msra.mxu0 0.0
    %124 = vmatprep.subr.mxu0 0.0
    %125 = vmatpush1.msra.mxu0 0.0
    %126 = vmatprep.subr.mxu0 0.0
    %127 = vmatpush1.msra.mxu0 0.0
    %128 = vmatprep.subr.mxu0 0.0
    %129 = vmatpush1.msra.mxu0 0.0
    %130 = vmatprep.subr.mxu0 0.0
    %131 = vmatpush1.msra.mxu0 0.0
    %132 = vmatprep.mubr.f32.mxu0 0.0
    %133 = vmatmul.mubr.f32.gmra.mrb[0].mxu0 %v66
    %v134 = vpop.f32.mrb[0].mxu0
    %v135 = vadd.f32 0.0, %v134
    %v136 = vpop.f32.mrb[0].mxu0
    %137 = vdwg.mxu0
    %vm138 = vcmask 64512
    %v140 = vsel %vm138, %v56, 0
    %v143 = vsel %vm138, %v57, 0
    %145 = vmatprep.subr.mxu0 0.0
    %146 = vmatpush1.msra.mxu0 %v135
    %147 = vmatprep.subr.mxu0 0.0
    %148 = vmatpush1.msra.mxu0 0.0
    %149 = vmatprep.subr.mxu0 0.0
    %150 = vmatpush1.msra.mxu0 0.0
    %151 = vmatprep.subr.mxu0 0.0
    %152 = vmatpush1.msra.mxu0 0.0
    %153 = vmatprep.subr.mxu0 0.0
    %154 = vmatpush1.msra.mxu0 0.0
    %155 = vmatprep.subr.mxu0 0.0
    %156 = vmatpush1.msra.mxu0 0.0
    %157 = vmatprep.subr.mxu0 0.0
    %158 = vmatpush1.msra.mxu0 0.0
    %159 = vmatprep.subr.mxu0 0.0
    %160 = vmatpush1.msra.mxu0 0.0
    %161 = vmatprep.subr.mxu0 0.0
    %162 = vmatpush1.msra.mxu0 0.0
    %163 = vmatprep.subr.mxu0 0.0
    %164 = vmatpush1.msra.mxu0 0.0
    %165 = vmatprep.subr.mxu0 0.0
    %166 = vmatpush1.msra.mxu0 0.0
    %167 = vmatprep.subr.mxu0 0.0
    %168 = vmatpush1.msra.mxu0 0.0
    %169 = vmatprep.subr.mxu0 0.0
    %170 = vmatpush1.msra.mxu0 0.0
    %171 = vmatprep.subr.mxu0 0.0
    %172 = vmatpush1.msra.mxu0 0.0
    %173 = vmatprep.subr.mxu0 0.0
    %174 = vmatpush1.msra.mxu0 0.0
    %175 = vmatprep.subr.mxu0 0.0
    %176 = vmatpush1.msra.mxu0 0.0
    %177 = vmatprep.subr.mxu0 0.0
    %178 = vmatpush1.msra.mxu0 0.0
    %179 = vmatprep.subr.mxu0 0.0
    %180 = vmatpush1.msra.mxu0 0.0
    %181 = vmatprep.subr.mxu0 0.0
    %182 = vmatpush1.msra.mxu0 0.0
    %183 = vmatprep.subr.mxu0 0.0
    %184 = vmatpush1.msra.mxu0 0.0
    %185 = vmatprep.subr.mxu0 0.0
    %186 = vmatpush1.msra.mxu0 0.0
    %187 = vmatprep.subr.mxu0 0.0
    %188 = vmatpush1.msra.mxu0 0.0
    %189 = vmatprep.subr.mxu0 0.0
    %190 = vmatpush1.msra.mxu0 0.0
    %191 = vmatprep.subr.mxu0 0.0
    %192 = vmatpush1.msra.mxu0 0.0
    %193 = vmatprep.subr.mxu0 0.0
    %194 = vmatpush1.msra.mxu0 0.0
    %195 = vmatprep.subr.mxu0 0.0
    %196 = vmatpush1.msra.mxu0 0.0
    %197 = vmatprep.subr.mxu0 0.0
    %198 = vmatpush1.msra.mxu0 0.0
    %199 = vmatprep.subr.mxu0 0.0
    %200 = vmatpush1.msra.mxu0 0.0
    %201 = vmatprep.subr.mxu0 0.0
    %202 = vmatpush1.msra.mxu0 0.0
    %203 = vmatprep.subr.mxu0 0.0
    %204 = vmatpush1.msra.mxu0 0.0
    %205 = vmatprep.subr.mxu0 0.0
    %206 = vmatpush1.msra.mxu0 0.0
    %207 = vmatprep.subr.mxu0 0.0
    %208 = vmatpush1.msra.mxu0 0.0
    %209 = vmatprep.mubr.f32.mxu0 0.0
    %210 = vmatmul.mubr.f32.gmra.mrb[0].mxu0 %v140
    %v211 = vpop.f32.mrb[0].mxu0
    %v212 = vadd.f32 %v58, %v211
    %v213 = vpop.f32.mrb[0].mxu0
    %214 = vmatprep.mubr.f32.mxu0 0.0
    %215 = vmatmul.mubr.f32.gmra.mrb[0].mxu0 %v143
    %v216 = vpop.f32.mrb[0].mxu0
    %v217 = vadd.f32 %v59, %v216
    %v218 = vpop.f32.mrb[0].mxu0
    %219 = vdwg.mxu0
    %v220 = vxor.u32 %v212, 2147483648
    %v221 = vxor.u32 %v217, 2147483648
    %v222 = vmul.f32 %v220, 1.442695
    %v223 = vpow.pop %v222
    %v224 = vmul.f32 %v221, 1.442695
    %v225 = vpow.pop %v224
    %v226 = vadd.f32 %v223, 1.0
    %v227 = vadd.f32 %v225, 1.0
    %v228 = vrcp.pop %v226
    %v229 = vmul.f32 1.0, %v228
    %v230 = vrcp.pop %v227
    %v231 = vmul.f32 1.0, %v230
    %v232 = vmul.f32 %v212, %v229
    %v233 = vmul.f32 %v217, %v231
    %234 = vrot.lane.b32.xlu0 %v232, 1
    %v235 = vpop.permute.xlu0 %234
    %236 = vrot.lane.b32.xlu0 %v233, 1
    %v237 = vpop.permute.xlu0 %236
    %v238 = vlaneseq
    %v239 = vshrl.u32 %v238, 7
    %v240 = vsub.s32 0, %v239
    %v241 = vrot.slane %v62, %v240
    %v242 = vmul.f32 %v235, %v241
    %v243 = vmul.f32 %v237, %v241
    %244 = vrot.lane.b32.xlu0 %v232, 127
    %v245 = vpop.permute.xlu0 %244
    %246 = vrot.lane.b32.xlu0 %v233, 127
    %v247 = vpop.permute.xlu0 %246
    %v248 = vlaneseq
    %v249 = vshrl.u32 %v248, 7
    %v250 = vsub.s32 0, %v249
    %v251 = vrot.slane %v63, %v250
    %v252 = vmul.f32 %v245, %v251
    %v253 = vmul.f32 %v247, %v251
    %vm254 = vcmask 400384
    %v256 = vsel %vm254, %v60, 0
    %v259 = vsel %vm254, %v61, 0
    %vm261 = vcmask 1040384
    %v263 = vsel %vm261, 1.0, 0
    %265 = vmatprep.subr.mxu0 0.0
    %266 = vmatpush1.msra.mxu0 %v242
    %267 = vmatprep.subr.mxu0 0.0
    %268 = vmatpush1.msra.mxu0 %v243
    %269 = vmatprep.subr.mxu0 0.0
    %270 = vmatpush1.msra.mxu0 %v232
    %271 = vmatprep.subr.mxu0 0.0
    %272 = vmatpush1.msra.mxu0 %v233
    %273 = vmatprep.subr.mxu0 0.0
    %274 = vmatpush1.msra.mxu0 %v252
    %275 = vmatprep.subr.mxu0 0.0
    %276 = vmatpush1.msra.mxu0 %v253
    %277 = vmatprep.subr.mxu0 0.0
    %278 = vmatpush1.msra.mxu0 %v263
    %279 = vmatprep.subr.mxu0 0.0
    %280 = vmatpush1.msra.mxu0 0.0
    %281 = vmatprep.subr.mxu0 0.0
    %282 = vmatpush1.msra.mxu0 0.0
    %283 = vmatprep.subr.mxu0 0.0
    %284 = vmatpush1.msra.mxu0 0.0
    %285 = vmatprep.subr.mxu0 0.0
    %286 = vmatpush1.msra.mxu0 0.0
    %287 = vmatprep.subr.mxu0 0.0
    %288 = vmatpush1.msra.mxu0 0.0
    %289 = vmatprep.subr.mxu0 0.0
    %290 = vmatpush1.msra.mxu0 0.0
    %291 = vmatprep.subr.mxu0 0.0
    %292 = vmatpush1.msra.mxu0 0.0
    %293 = vmatprep.subr.mxu0 0.0
    %294 = vmatpush1.msra.mxu0 0.0
    %295 = vmatprep.subr.mxu0 0.0
    %296 = vmatpush1.msra.mxu0 0.0
    %297 = vmatprep.subr.mxu0 0.0
    %298 = vmatpush1.msra.mxu0 0.0
    %299 = vmatprep.subr.mxu0 0.0
    %300 = vmatpush1.msra.mxu0 0.0
    %301 = vmatprep.subr.mxu0 0.0
    %302 = vmatpush1.msra.mxu0 0.0
    %303 = vmatprep.subr.mxu0 0.0
    %304 = vmatpush1.msra.mxu0 0.0
    %305 = vmatprep.subr.mxu0 0.0
    %306 = vmatpush1.msra.mxu0 0.0
    %307 = vmatprep.subr.mxu0 0.0
    %308 = vmatpush1.msra.mxu0 0.0
    %309 = vmatprep.subr.mxu0 0.0
    %310 = vmatpush1.msra.mxu0 0.0
    %311 = vmatprep.subr.mxu0 0.0
    %312 = vmatpush1.msra.mxu0 0.0
    %313 = vmatprep.subr.mxu0 0.0
    %314 = vmatpush1.msra.mxu0 0.0
    %315 = vmatprep.subr.mxu0 0.0
    %316 = vmatpush1.msra.mxu0 0.0
    %317 = vmatprep.subr.mxu0 0.0
    %318 = vmatpush1.msra.mxu0 0.0
    %319 = vmatprep.subr.mxu0 0.0
    %320 = vmatpush1.msra.mxu0 0.0
    %321 = vmatprep.subr.mxu0 0.0
    %322 = vmatpush1.msra.mxu0 0.0
    %323 = vmatprep.subr.mxu0 0.0
    %324 = vmatpush1.msra.mxu0 0.0
    %325 = vmatprep.subr.mxu0 0.0
    %326 = vmatpush1.msra.mxu0 0.0
    %327 = vmatprep.subr.mxu0 0.0
    %328 = vmatpush1.msra.mxu0 0.0
    %329 = vmatprep.mubr.f32.mxu0 0.0
    %330 = vmatmul.mubr.f32.gmra.mrb[0].mxu0 %v256
    %v331 = vpop.f32.mrb[0].mxu0
    %v332 = vadd.f32 0.0, %v331
    %v333 = vpop.f32.mrb[0].mxu0
    %334 = vmatprep.mubr.f32.mxu0 0.0
    %335 = vmatmul.mubr.f32.gmra.mrb[0].mxu0 %v259
    %v336 = vpop.f32.mrb[0].mxu0
    %v337 = vadd.f32 0.0, %v336
    %v338 = vpop.f32.mrb[0].mxu0
    %339 = vdwg.mxu0
    %340 = vst.msk [vmem:[%s2] sm:$0xff] %vm64, %v332
    %341 = vst.msk [vmem:[%s2 + $0x8] sm:$0xff] %vm64, %v337
    %344 = vrot.lane.b32.xlu0 %v332, 64
    %v345 = vpop.permute.xlu0 %344
    %346 = vrot.lane.b32.xlu0 %v337, 64
    %v347 = vpop.permute.xlu0 %346
    %s350 = scalar_lea.vmem %s2, 16
    %351 = vst.msk [vmem:[%s350] sm:$0xff] %vm64, %v345
    %352 = vst.msk [vmem:[%s350 + $0x8] sm:$0xff] %vm64, %v347
    // Predicated region
    $region18: #{fmri_to_control.1} parent=1 // pred_check
      _
    $region19: #{fmri_to_control.1} parent=1 // pred_check_branch
      %354 = sbr.rel (0) target = $region21
    $region20: #{fmri_to_control.1} parent=1 // pred_region
      _
    $region21: #{fmri_to_control.1} parent=1 // pred_fallthru
      _
    // Predicated region
    $region22: #{fmri_to_control.1} parent=1 // pred_check
      _
    $region23: #{fmri_to_control.1} parent=1 // pred_check_branch
      %356 = sbr.rel (0) target = $region25
    $region24: #{fmri_to_control.1} parent=1 // pred_region
      _
    $region25: #{fmri_to_control.1} parent=1 // pred_fallthru
      _
    %357 = vsyncpa [#allocation3], 1
    %358 = vsyncpa [#allocation5], 1

</llo_original>
